<compile_context>
chip_gen: v7x
topology: tpu7x:2x2x1
jax: 0.10.0
libtpu: 0.0.40
codegen_flags: <defaults>
</compile_context>

<pallas_src>
import jax
import jax.numpy as jnp
import numpy as np
from jax.experimental import pallas as pl
from jax.experimental.pallas import tpu as pltpu


def _round_up(x, m):
    return (x + m - 1) // m * m


def _transe_kernel(h_ref, r_ref, t_ref, o_ref):
    # Blocks are (D, TB): batch on the lane axis, features on sublanes.
    diff = h_ref[...] + r_ref[...] - t_ref[...]          # VPU, native dtype
    diff = diff.astype(jnp.float32)                      # single cast for the accumulate
    ssq = jnp.sum(diff * diff, axis=0, keepdims=True)    # sublane reduce -> (1, TB)
    o_ref[0] = jnp.sqrt(ssq)                             # lane-dense (1, TB) store


def transe_score(entity_emb, relation_emb, head, relation, tail, *, block_b=None):
    """Pallas TransE score: ||E[head] + R[relation] - E[tail]||_2 per batch row."""
    B = int(head.shape[0])
    D = int(entity_emb.shape[1])
    itemsize = jnp.dtype(entity_emb.dtype).itemsize

    # --- Gather directly in the transposed layout (no batch-sized transpose). ---
    # The table transposes are tiny one-offs (num_entities/relations x D);
    # one fused gather covers head+tail.
    et = entity_emb.T                                           # (D, Ne)
    rt = relation_emb.T                                         # (D, Nr)
    ht = jnp.take(et, jnp.concatenate([head, tail], axis=0), axis=1)  # (D, 2B)
    h = ht[:, :B]
    t = ht[:, B:]
    r = jnp.take(rt, relation, axis=1)                          # (D, B)

    # --- Per-generation tile sizing. ---
    vmem_cap = 64 * 1024 * 1024            # conservative fallback (v7x physical)
    try:
        vmem_cap = int(pltpu.get_tpu_info().vmem_capacity_bytes)
    except Exception:
        pass
    scoped_vmem = min(vmem_cap // 2, 32 * 1024 * 1024)   # 32 MiB target on v5e/v6e/v7x
    input_budget = (scoped_vmem * 7) // 10               # ~30% headroom (outputs + scratch)
    per_row_bytes = 3 * 2 * D * itemsize                 # 3 inputs x 2 pipeline buffers
    vmem_tb = max(128, (input_budget // per_row_bytes) // 128 * 128)

    # Aim for ~2 MiB per input block; at least 2048 rows when D is small.
    target_tb = max(2048, (2 * 1024 * 1024) // max(1, D * itemsize))
    target_tb = max(128, target_tb // 128 * 128)
    if block_b is not None:
        target_tb = max(128, int(block_b) // 128 * 128)

    bp128 = _round_up(B, 128)
    tb = min(target_tb, vmem_tb, bp128)
    if bp128 >= 256:
        # Keep grid >= 2 so the "parallel" batch axis shards across both
        # TensorCores on v7x (harmless single-TC elsewhere).
        tb = min(tb, max(128, (bp128 // 2) // 128 * 128))
    tb = max(tb, 128)
    # TODO(synk): for very large D the forced tb=128 tiles could use
    # pipeline_mode=pl.Buffered(3) (or a feature-dim reduction grid axis).

    bp = _round_up(B, tb)
    grid = bp // tb
    pad = bp - B
    if pad:
        h = jnp.pad(h, ((0, 0), (0, pad)))
        r = jnp.pad(r, ((0, 0), (0, pad)))
        t = jnp.pad(t, ((0, 0), (0, pad)))

    # Explicit VMEM limit: cover the actual buffers with margin, never below
    # the 32 MiB scoped target, never above physical capacity.
    needed = 3 * 2 * D * tb * itemsize + 2 * tb * 4
    vmem_limit = int(min(vmem_cap, max(scoped_vmem, (needed * 5) // 4 + (2 << 20))))

    out = pl.pallas_call(
        _transe_kernel,
        out_shape=jax.ShapeDtypeStruct((grid, 1, tb), jnp.float32),
        grid_spec=pltpu.PrefetchScalarGridSpec(
            num_scalar_prefetch=0,
            grid=(grid,),
            in_specs=[
                pl.BlockSpec((D, tb), lambda i: (0, i)),
                pl.BlockSpec((D, tb), lambda i: (0, i)),
                pl.BlockSpec((D, tb), lambda i: (0, i)),
            ],
            out_specs=pl.BlockSpec((1, 1, tb), lambda i: (i, 0, 0)),
        ),
        compiler_params=pltpu.CompilerParams(
            dimension_semantics=("parallel",),
            vmem_limit_bytes=vmem_limit,
        ),
    )(h, r, t)
    return out.reshape(-1)[:B]


def xavier_uniform(key, shape, dtype=jnp.float32):
    # torch.nn.init.xavier_uniform_ on a 2D weight: fan_out = shape[0], fan_in = shape[1]
    fan_out, fan_in = shape
    bound = float(np.sqrt(6.0 / (fan_in + fan_out)))
    return jax.random.uniform(key, shape, dtype=dtype, minval=-bound, maxval=bound)


if __name__ == "__main__":
    num_entities = 64
    num_relations = 16
    embedding_dim = 32
    batch = 8
    # TODO(synk): margin is only used in the TransE loss, not in forward(); unused here.

    key = jax.random.PRNGKey(0)
    k_ent, k_rel, k_h, k_r, k_t = jax.random.split(key, 5)

    entity_emb = xavier_uniform(k_ent, (num_entities, embedding_dim))
    relation_emb = xavier_uniform(k_rel, (num_relations, embedding_dim))

    head = jax.random.randint(k_h, (batch,), 0, num_entities, dtype=jnp.int32)
    relation = jax.random.randint(k_r, (batch,), 0, num_relations, dtype=jnp.int32)
    tail = jax.random.randint(k_t, (batch,), 0, num_entities, dtype=jnp.int32)

    score = jax.jit(transe_score)(entity_emb, relation_emb, head, relation, tail)
    score = jax.block_until_ready(score)

    # Pure-JAX reference check (same semantics as the PyTorch forward).
    ref = jnp.linalg.norm(
        entity_emb[head] + relation_emb[relation] - entity_emb[tail], axis=1)
    np.testing.assert_allclose(np.asarray(score), np.asarray(ref), rtol=1e-5, atol=1e-5)

    print("KERNEL_OK")
</pallas_src>

<mosaic_0001>
module attributes {stable_mosaic.version = 11 : i64} {
  func.func @_transe_kernel(%arg0: i32, %arg1: memref<32x128xf32, #tpu.memory_space<vmem>>, %arg2: memref<32x128xf32, #tpu.memory_space<vmem>>, %arg3: memref<32x128xf32, #tpu.memory_space<vmem>>, %arg4: memref<1x1x128xf32, #tpu.memory_space<vmem>>) attributes {dimension_semantics = [#tpu.dimension_semantics<parallel>], iteration_bounds = array<i64: 1>, scalar_prefetch = 0 : i64, scratch_operands = 0 : i64, tpu.core_type = #tpu.core_type<tc>, window_params = [{transform_indices = @transform_0, window_bounds = array<i64: 32, 128>}, {transform_indices = @transform_1, window_bounds = array<i64: 32, 128>}, {transform_indices = @transform_2, window_bounds = array<i64: 32, 128>}, {transform_indices = @transform_3, window_bounds = array<i64: 1, 1, 128>}]} {
    %c0 = arith.constant 0 : index
    %c0_0 = arith.constant 0 : index
    %0 = vector.load %arg1[%c0, %c0_0] : memref<32x128xf32, #tpu.memory_space<vmem>>, vector<32x128xf32>
    %c0_1 = arith.constant 0 : index
    %c0_2 = arith.constant 0 : index
    %1 = vector.load %arg2[%c0_1, %c0_2] : memref<32x128xf32, #tpu.memory_space<vmem>>, vector<32x128xf32>
    %2 = arith.addf %0, %1 : vector<32x128xf32>
    %c0_3 = arith.constant 0 : index
    %c0_4 = arith.constant 0 : index
    %3 = vector.load %arg3[%c0_3, %c0_4] : memref<32x128xf32, #tpu.memory_space<vmem>>, vector<32x128xf32>
    %4 = arith.subf %2, %3 : vector<32x128xf32>
    %5 = arith.mulf %4, %4 : vector<32x128xf32>
    %cst = arith.constant dense<0.000000e+00> : vector<128xf32>
    %6 = vector.multi_reduction <add>, %5, %cst [0] : vector<32x128xf32> to vector<128xf32>
    %7 = vector.shape_cast %6 : vector<128xf32> to vector<1x128xf32>
    %8 = math.sqrt %7 : vector<1x128xf32>
    %c0_5 = arith.constant 0 : index
    %c0_6 = arith.constant 0 : index
    %c0_7 = arith.constant 0 : index
    %9 = vector.load %arg4[%c0_5, %c0_6, %c0_7] : memref<1x1x128xf32, #tpu.memory_space<vmem>>, vector<1x1x128xf32>
    %10 = vector.shape_cast %9 : vector<1x1x128xf32> to vector<1x128xf32>
    %11 = vector.shape_cast %8 : vector<1x128xf32> to vector<1x1x128xf32>
    tpu.vector_store %arg4[%c0_5, %c0_6, %c0_7], %11 {strides = array<i32>} : memref<1x1x128xf32, #tpu.memory_space<vmem>>, vector<1x1x128xf32>,
    return
  }
  func.func @transform_0(%arg0: i32) -> (i32, i32) {
    %c0_i32 = arith.constant 0 : i32
    %c0_i32_0 = arith.constant 0 : i32
    return %c0_i32, %arg0 : i32, i32
  }
  func.func @transform_1(%arg0: i32) -> (i32, i32) {
    %c0_i32 = arith.constant 0 : i32
    %c0_i32_0 = arith.constant 0 : i32
    return %c0_i32, %arg0 : i32, i32
  }
  func.func @transform_2(%arg0: i32) -> (i32, i32) {
    %c0_i32 = arith.constant 0 : i32
    %c0_i32_0 = arith.constant 0 : i32
    return %c0_i32, %arg0 : i32, i32
  }
  func.func @transform_3(%arg0: i32) -> (i32, i32, i32) {
    %c0_i32 = arith.constant 0 : i32
    %c0_i32_0 = arith.constant 0 : i32
    %c0_i32_1 = arith.constant 0 : i32
    return %arg0, %c0_i32, %c0_i32_0 : i32, i32, i32
  }
}

</mosaic_0001>

<llo_original>
// kernel: transe_score.1
$region0: #{transe_score.1}
  #allocation0 [shape = 'u32[]', space=smem, size = 0x4, offset = 0x4, fixed_abs, tag = 'smem constant byte address 0x4 - core index']
  #allocation1 [shape = 'u32[144,128]{1,0:T(1,128)}', space=vmem, size = 0x12000, scoped, tag = 'internal scratch']
  %s0 = inlined_call_operand.vmem [shape: f32[32,128], index: 0, kind: input, shape index: {}]
  %s1 = inlined_call_operand.vmem [shape: f32[32,128], index: 1, kind: input, shape index: {}]
  %s2 = inlined_call_operand.vmem [shape: f32[32,128], index: 2, kind: input, shape index: {}]
  %s3 = inlined_call_operand.vmem [shape: f32[1,1,128], index: 3, kind: output, shape index: {}]
  %s4 = sld [smem:[#allocation0]]
  $region22: #{transe_score.1} parent=0
    _
  %s6 = ssub.s32 1, %s4
  %s7 = scalar_select 0, %s6, %s4
  // Predicated region
  $region2: #{transe_score.1} parent=0 // pred_check
    _
  $region3: #{transe_score.1} parent=0 // pred_check_branch
    %9 = sbr.rel (0) target = $region5
  $region4: #{transe_score.1} parent=0 // pred_region
    _
  $region5: #{transe_score.1} parent=0 // pred_fallthru
    _
  // Predicated region
  $region6: #{transe_score.1} parent=0 // pred_check
    _
  $region7: #{transe_score.1} parent=0 // pred_check_branch
    %11 = sbr.rel (0) target = $region9
  $region8: #{transe_score.1} parent=0 // pred_region
    _
  $region9: #{transe_score.1} parent=0 // pred_fallthru
    _
  // Predicated region
  $region10: #{transe_score.1} parent=0 // pred_check
    _
  $region11: #{transe_score.1} parent=0 // pred_check_branch
    %13 = sbr.rel (0) target = $region13
  $region12: #{transe_score.1} parent=0 // pred_region
    _
  $region13: #{transe_score.1} parent=0 // pred_fallthru
    _
  %v14 = vld [vmem:[%s0] sm:$0xff]
  %v15 = vld [vmem:[%s0 + $0x8] sm:$0xff]
  %v16 = vld [vmem:[%s0 + $0x10] sm:$0xff]
  %v17 = vld [vmem:[%s0 + $0x18] sm:$0xff]
  %v18 = vld [vmem:[%s1] sm:$0xff]
  %v19 = vld [vmem:[%s1 + $0x8] sm:$0xff]
  %v20 = vld [vmem:[%s1 + $0x10] sm:$0xff]
  %v21 = vld [vmem:[%s1 + $0x18] sm:$0xff]
  %v22 = vadd.f32 %v14, %v18
  %v23 = vadd.f32 %v15, %v19
  %v24 = vadd.f32 %v16, %v20
  %v25 = vadd.f32 %v17, %v21
  %v26 = vld [vmem:[%s2] sm:$0xff]
  %v27 = vld [vmem:[%s2 + $0x8] sm:$0xff]
  %v28 = vld [vmem:[%s2 + $0x10] sm:$0xff]
  %v29 = vld [vmem:[%s2 + $0x18] sm:$0xff]
  %v30 = vsub.f32 %v22, %v26
  %v31 = vsub.f32 %v23, %v27
  %v32 = vsub.f32 %v24, %v28
  %v33 = vsub.f32 %v25, %v29
  %v34 = vmul.f32 %v30, %v30
  %v35 = vmul.f32 %v31, %v31
  %v36 = vmul.f32 %v32, %v32
  %v37 = vmul.f32 %v33, %v33
  %v38 = vadd.f32 %v34, %v35
  %v39 = vadd.f32 %v38, %v36
  %v40 = vadd.f32 %v39, %v37
  %v41 = vrot.slane %v40, 4
  %v42 = vadd.f32 %v40, %v41
  %v43 = vrot.slane %v42, 2
  %v44 = vadd.f32 %v42, %v43
  %v45 = vrot.slane %v44, 1
  %v46 = vadd.f32 %v44, %v45
  %v47 = vrsqrt.pop %v46
  %v48 = vmul.f32 %v46, %v47
  %vm49 = vcmp.eq.f32.partialorder %v46, inf
  %v50 = vsel %vm49, %v46, %v48
  %vm51 = vcmp.eq.f32.partialorder %v46, 0.0
  %v52 = vand.u32 %v46, 2147483648
  %v53 = vsel %vm51, %v52, %v50
  %54 = vst [vmem:[%s3] sm:$0x1] %v53
  // Predicated region
  $region14: #{transe_score.1} parent=0 // pred_check
    _
  $region15: #{transe_score.1} parent=0 // pred_check_branch
    %56 = sbr.rel (0) target = $region17
  $region16: #{transe_score.1} parent=0 // pred_region
    _
  $region17: #{transe_score.1} parent=0 // pred_fallthru
    _
  // Predicated region
  $region18: #{transe_score.1} parent=0 // pred_check
    _
  $region19: #{transe_score.1} parent=0 // pred_check_branch
    %58 = sbr.rel (0) target = $region21
  $region20: #{transe_score.1} parent=0 // pred_region
    _
  $region21: #{transe_score.1} parent=0 // pred_fallthru
    _

</llo_original>
